<compile_context>
chip_gen: v7x
topology: tpu7x:2x2x1
jax: 0.10.0
libtpu: 0.0.40
codegen_flags: <defaults>
</compile_context>

<pallas_src>
import functools
import math

import jax
import jax.numpy as jnp
from jax import lax
from jax.experimental import pallas as pl
from jax.experimental.pallas import tpu as pltpu


# --------------------------------------------------------------------------
# Kernel body
# --------------------------------------------------------------------------
def _sdpa_kernel(*refs, scale, has_mask, emit_attn, exp_dtype):
    if has_mask:
        q_ref, k_ref, v_ref, mask_ref = refs[:4]
        out_refs = refs[4:]
    else:
        q_ref, k_ref, v_ref = refs[:3]
        mask_ref = None
        out_refs = refs[3:]
    ctx_ref = out_refs[0]
    attn_ref = out_refs[1] if emit_attn else None

    q = q_ref[...]            # (G, TQ, D)  input dtype, fed straight to MXU
    k = k_ref[...]            # (G, S,  D)
    v = v_ref[...]            # (G, S,  D)

    # Fold 1/sqrt(d_k) into Q (TQ*D multiplies instead of TQ*S).
    qs = q * jnp.asarray(scale, dtype=q.dtype)

    # scores[g, q, kk] = sum_d qs[g, q, d] * k[g, kk, d]   (no explicit K^T)
    scores = lax.dot_general(
        qs, k,
        dimension_numbers=(((2,), (2,)), ((0,), (0,))),
        preferred_element_type=jnp.float32)               # (G, TQ, S) f32

    if mask_ref is not None:
        # int8 block compared directly; broadcast over G when shared.
        scores = jnp.where(mask_ref[...] == 0,
                           jnp.float32(-1000000000.0), scores)

    # Numerically stable softmax; exp optionally in bf16 (v6e/v7x EUP).
    row_max = jnp.max(scores, axis=-1, keepdims=True)
    shifted = scores - row_max
    if exp_dtype == jnp.float32:
        e = jnp.exp(shifted)
        denom = jnp.sum(e, axis=-1, keepdims=True)
    else:
        e = jnp.exp(shifted.astype(exp_dtype))
        denom = jnp.sum(e.astype(jnp.float32), axis=-1, keepdims=True)

    # Reciprocal on the (G,TQ,1) denominator: EUP approx + one Newton step.
    inv = pl.reciprocal(denom, approx=True)
    inv = inv * (2.0 - denom * inv)

    if emit_attn:
        attn = e * inv                                     # (G, TQ, S)
        ctx = lax.dot_general(
            attn.astype(v.dtype), v,
            dimension_numbers=(((2,), (1,)), ((0,), (0,))),
            preferred_element_type=jnp.float32)            # (G, TQ, D)
        attn_ref[...] = attn.astype(attn_ref.dtype)
    else:
        # Deferred normalization: normalize the small (G,TQ,D) result instead
        # of the (G,TQ,S) probabilities.
        ctx = lax.dot_general(
            e.astype(v.dtype), v,
            dimension_numbers=(((2,), (1,)), ((0,), (0,))),
            preferred_element_type=jnp.float32)
        ctx = ctx * inv
    ctx_ref[...] = ctx.astype(ctx_ref.dtype)


# --------------------------------------------------------------------------
# Generation-aware planning
# --------------------------------------------------------------------------
def _chip_info():
    """(vmem_capacity_bytes, tensorcores_per_chip, bf16_eup_supported)."""
    kind = ""
    try:
        kind = jax.devices()[0].device_kind.lower()
    except Exception:
        pass
    vmem_cap = None
    try:
        vmem_cap = getattr(pltpu.get_tpu_info(), "vmem_capacity_bytes", None)
    except Exception:
        vmem_cap = None
    is_v7 = "v7" in kind
    if vmem_cap is None:
        # Conservative defaults if the query fails.
        vmem_cap = (64 << 20) if (is_v7 or not kind) else (128 << 20)
    n_cores = 2 if is_v7 else 1
    bf16_eup = ("v6" in kind) or is_v7
    return int(vmem_cap), n_cores, bf16_eup


def _plan_tiles(BH, H, S, D, itemsize, emit_attn, mask_mode, vmem_cap, n_cores):
    """Pick (S_pad, TQ, heads-per-step G, estimated step VMEM bytes)."""
    big_vmem = vmem_cap >= (100 << 20)
    # Total per-step budget (includes double buffering + f32 temporaries).
    budget = (40 << 20) if big_vmem else (20 << 20)

    if S <= 256:
        s_pad = S
        tq_cands = [S]
    else:
        s_pad = ((S + 127) // 128) * 128
        max_tq = 512 if big_vmem else 256
        tq_cands = [c for c in (512, 256, 128) if c <= max_tq and s_pad % c == 0]
        if not tq_cands:
            tq_cands = [128]

    need_g_divides_h = (mask_mode == "batch")
    max_g = BH
    if n_cores >= 2 and BH >= 2:
        max_g = max(1, BH // 2)        # guarantee >= 2 head-groups for megacore

    def step_bytes(g, tq):
        # Q, ctx, K, V blocks, all double-buffered.
        b = 2 * itemsize * g * (2 * tq * D + 2 * s_pad * D)
        if emit_attn:
            b += 2 * itemsize * g * tq * s_pad
        if mask_mode is not None:
            mb = g if mask_mode == "per_head" else 1
            b += 2 * mb * tq * s_pad                       # int8 mask
        b += 3 * 4 * g * tq * s_pad                        # f32 softmax temps
        return b

    def best_g(tq):
        g = 1
        for cand in range(1, max_g + 1):
            if BH % cand:
                continue
            if need_g_divides_h and H % cand:
                continue
            if step_bytes(cand, tq) <= budget:
                g = cand
        return g

    for tq in tq_cands:
        if step_bytes(1, tq) <= budget:
            g = best_g(tq)
            return s_pad, tq, g, step_bytes(g, tq)
    tq = tq_cands[-1]
    return s_pad, tq, 1, step_bytes(1, tq)


# --------------------------------------------------------------------------
# Public wrapper
# --------------------------------------------------------------------------
def scaled_dot_product_attention(Q, K, V, attn_mask=None, *, d_k=None,
                                 return_attn=True, attn_dtype=None,
                                 exp_dtype=None):
    """Pallas TPU ScaledDotProductAttention.forward.

    Q, K, V: [B, H, S, d_k].  attn_mask: optional, broadcastable to
    [B, H, S, S]; 0 means "masked out".  Returns (context, attn); attn is None
    when return_attn=False (the fast path: no S^2 HBM write).
    """
    B, H, S, D = Q.shape
    if d_k is None:
        d_k = D
    scale = 1.0 / math.sqrt(d_k)
    BH = B * H

    q = Q.reshape(BH, S, D)
    k = K.reshape(BH, S, D)
    v = V.reshape(BH, S, D)
    itemsize = jnp.dtype(Q.dtype).itemsize

    vmem_cap, n_cores, bf16_eup = _chip_info()

    # exp dtype: bf16 only where the EUP supports it and inputs are bf16.
    if exp_dtype is None:
        exp_dtype = jnp.bfloat16 if (bf16_eup and
                                     jnp.dtype(Q.dtype) == jnp.bfloat16) \
            else jnp.float32
    exp_dtype = jnp.dtype(exp_dtype)

    # ---- mask normalization: keep it small (int8) and shared where possible.
    mask_arr = None
    mask_mode = None
    if attn_mask is not None:
        m = jnp.asarray(attn_mask)
        if m.ndim < 4:
            m = m.reshape((1,) * (4 - m.ndim) + m.shape)
        Mb, Mh = m.shape[0], m.shape[1]
        if Mb not in (1, B) or Mh not in (1, H):
            m = jnp.broadcast_to(m, (B, H) + m.shape[2:])
            Mb, Mh = B, H
        m = jnp.broadcast_to(m, (Mb, Mh, S, S)).astype(jnp.int8)
        if Mb == 1 and Mh == 1:
            mask_mode, mask_arr = "shared", m.reshape(1, S, S)
        elif Mh == 1:
            mask_mode, mask_arr = "batch", m.reshape(B, S, S)
        else:
            mask_mode = "per_head"
            mask_arr = jnp.broadcast_to(m, (B, H, S, S)).reshape(BH, S, S)

    S_pad, TQ, G, est = _plan_tiles(BH, H, S, D, itemsize, return_attn,
                                    mask_mode, vmem_cap, n_cores)

    # ---- pad S so lane-dense 128-multiple tiles are available; padded keys
    # are masked out (exp underflows to exactly 0), padded query rows are
    # sliced off after the call.
    if S_pad > S:
        pad = S_pad - S
        q = jnp.pad(q, ((0, 0), (0, pad), (0, 0)))
        k = jnp.pad(k, ((0, 0), (0, pad), (0, 0)))
        v = jnp.pad(v, ((0, 0), (0, pad), (0, 0)))
        if mask_arr is not None:
            mask_arr = jnp.pad(mask_arr, ((0, 0), (0, pad), (0, pad)))
        else:
            key_valid = (jnp.arange(S_pad) < S).astype(jnp.int8)
            mask_arr = jnp.broadcast_to(key_valid[None, None, :],
                                        (1, S_pad, S_pad))
            mask_mode = "shared"

    n_groups = BH // G
    n_q = S_pad // TQ

    kv_spec = pl.BlockSpec((G, S_pad, D), lambda g, t: (g, 0, 0))
    q_spec = pl.BlockSpec((G, TQ, D), lambda g, t: (g, t, 0))
    ctx_spec = pl.BlockSpec((G, TQ, D), lambda g, t: (g, t, 0))
    attn_spec = pl.BlockSpec((G, TQ, S_pad), lambda g, t: (g, t, 0))

    in_specs = [q_spec, kv_spec, kv_spec]
    args = [q, k, v]
    if mask_arr is not None:
        if mask_mode == "shared":
            mspec = pl.BlockSpec((1, TQ, S_pad), lambda g, t: (0, t, 0))
        elif mask_mode == "batch":
            mspec = pl.BlockSpec((1, TQ, S_pad),
                                 lambda g, t, G=G, H=H: ((g * G) // H, t, 0))
        else:
            mspec = pl.BlockSpec((G, TQ, S_pad), lambda g, t: (g, t, 0))
        in_specs.append(mspec)
        args.append(mask_arr)

    out_dtype = Q.dtype
    if attn_dtype is None:
        attn_dtype = out_dtype
    if return_attn:
        out_shape = (jax.ShapeDtypeStruct((BH, S_pad, D), out_dtype),
                     jax.ShapeDtypeStruct((BH, S_pad, S_pad), attn_dtype))
        out_specs = (ctx_spec, attn_spec)
    else:
        out_shape = jax.ShapeDtypeStruct((BH, S_pad, D), out_dtype)
        out_specs = ctx_spec

    # VMEM limit: generation-aware ceiling, never below the estimated need.
    ceiling = (100 << 20) if vmem_cap >= (100 << 20) else (48 << 20)
    vmem_limit = max(32 << 20, min(ceiling, est + (16 << 20)), est + (8 << 20))
    vmem_limit = int(min(vmem_limit, vmem_cap))

    kernel = functools.partial(_sdpa_kernel, scale=scale,
                               has_mask=mask_arr is not None,
                               emit_attn=return_attn, exp_dtype=exp_dtype)

    result = pl.pallas_call(
        kernel,
        out_shape=out_shape,
        grid_spec=pltpu.PrefetchScalarGridSpec(
            num_scalar_prefetch=0,
            # g outer / t inner: K/V block index (g,0,0) is unchanged across
            # consecutive steps, so its DMA is skipped per query tile.
            grid=(n_groups, n_q),
            in_specs=in_specs,
            out_specs=out_specs,
        ),
        compiler_params=pltpu.CompilerParams(
            # Only the head-group axis is sharded across cores; the query-tile
            # axis stays "arbitrary" to protect K/V residency.
            dimension_semantics=("parallel", "arbitrary"),
            vmem_limit_bytes=vmem_limit,
        ),
    )(*args)

    if return_attn:
        ctx, attn = result
        ctx = ctx[:, :S, :].reshape(B, H, S, D)
        attn = attn[:, :S, :S].reshape(B, H, S, S)
        return ctx, attn
    ctx = result[:, :S, :].reshape(B, H, S, D)
    return ctx, None


# --------------------------------------------------------------------------
# Self-test
# --------------------------------------------------------------------------
if __name__ == "__main__":
    def reference(Q, K, V, mask=None, d_k=None):
        d_k = Q.shape[-1] if d_k is None else d_k
        scores = jnp.einsum("bhqd,bhkd->bhqk", Q, K) / math.sqrt(d_k)
        if mask is not None:
            scores = jnp.where(mask == 0, -1000000000.0, scores)
        attn = jax.nn.softmax(scores, axis=-1)
        ctx = jnp.einsum("bhqk,bhkd->bhqd", attn, V)
        return ctx, attn

    key = jax.random.PRNGKey(0)

    # 1) Small shape, no mask, attn returned.
    B, H, S, D = 2, 2, 8, 32
    kq, kk, kv, km, k2 = jax.random.split(key, 5)
    Q = jax.random.normal(kq, (B, H, S, D), dtype=jnp.float32)
    K = jax.random.normal(kk, (B, H, S, D), dtype=jnp.float32)
    V = jax.random.normal(kv, (B, H, S, D), dtype=jnp.float32)

    ctx, attn = scaled_dot_product_attention(Q, K, V, attn_mask=None, d_k=D)
    jax.block_until_ready((ctx, attn))
    ctx_ref, attn_ref = reference(Q, K, V, d_k=D)
    assert jnp.allclose(ctx, ctx_ref, atol=2e-5, rtol=2e-5)
    assert jnp.allclose(attn, attn_ref, atol=2e-5, rtol=2e-5)

    # 2) Per-batch padding-style mask, broadcast over heads ([B,1,S,S]).
    keep = (jax.random.uniform(km, (B, 1, 1, S)) > 0.3).astype(jnp.int32)
    keep = keep.at[..., 0].set(1)            # keep at least one key per row
    mask = jnp.broadcast_to(keep, (B, 1, S, S))
    ctx_m, attn_m = scaled_dot_product_attention(Q, K, V, attn_mask=mask, d_k=D)
    jax.block_until_ready((ctx_m, attn_m))
    ctx_mr, attn_mr = reference(Q, K, V, jnp.broadcast_to(mask, (B, H, S, S)),
                                d_k=D)
    assert jnp.allclose(ctx_m, ctx_mr, atol=2e-5, rtol=2e-5)
    assert jnp.allclose(attn_m, attn_mr, atol=2e-5, rtol=2e-5)

    # 3) Longer, non-128-multiple sequence, return_attn=False fast path
    #    (exercises key padding to S_pad=384, query tiling, deferred softmax
    #    normalization).
    B2, H2, S2, D2 = 1, 2, 300, 64
    kq2, kk2, kv2 = jax.random.split(k2, 3)
    Q2 = jax.random.normal(kq2, (B2, H2, S2, D2), dtype=jnp.float32)
    K2 = jax.random.normal(kk2, (B2, H2, S2, D2), dtype=jnp.float32)
    V2 = jax.random.normal(kv2, (B2, H2, S2, D2), dtype=jnp.float32)
    ctx2, attn2 = scaled_dot_product_attention(Q2, K2, V2, attn_mask=None,
                                               d_k=D2, return_attn=False)
    jax.block_until_ready(ctx2)
    assert attn2 is None
    ctx2_ref, _ = reference(Q2, K2, V2, d_k=D2)
    assert jnp.allclose(ctx2, ctx2_ref, atol=1e-3, rtol=1e-3)

    print("KERNEL_OK")
</pallas_src>

<mosaic_0001>
module attributes {stable_mosaic.version = 11 : i64} {
  func.func @_sdpa_kernel(%arg0: i32, %arg1: i32, %arg2: memref<4x8x32xf32, #tpu.memory_space<vmem>>, %arg3: memref<4x8x32xf32, #tpu.memory_space<vmem>>, %arg4: memref<4x8x32xf32, #tpu.memory_space<vmem>>, %arg5: memref<4x8x32xf32, #tpu.memory_space<vmem>>, %arg6: memref<4x8x8xf32, #tpu.memory_space<vmem>>) attributes {dimension_semantics = [#tpu.dimension_semantics<parallel>, #tpu.dimension_semantics<arbitrary>], iteration_bounds = array<i64: 1, 1>, scalar_prefetch = 0 : i64, scratch_operands = 0 : i64, tpu.core_type = #tpu.core_type<tc>, window_params = [{transform_indices = @transform_0, window_bounds = array<i64: 4, 8, 32>}, {transform_indices = @transform_1, window_bounds = array<i64: 4, 8, 32>}, {transform_indices = @transform_2, window_bounds = array<i64: 4, 8, 32>}, {transform_indices = @transform_3, window_bounds = array<i64: 4, 8, 32>}, {transform_indices = @transform_4, window_bounds = array<i64: 4, 8, 8>}]} {
    %c0 = arith.constant 0 : index
    %c0_0 = arith.constant 0 : index
    %c0_1 = arith.constant 0 : index
    %0 = vector.load %arg2[%c0, %c0_0, %c0_1] : memref<4x8x32xf32, #tpu.memory_space<vmem>>, vector<4x8x32xf32>
    %c0_2 = arith.constant 0 : index
    %c0_3 = arith.constant 0 : index
    %c0_4 = arith.constant 0 : index
    %1 = vector.load %arg3[%c0_2, %c0_3, %c0_4] : memref<4x8x32xf32, #tpu.memory_space<vmem>>, vector<4x8x32xf32>
    %c0_5 = arith.constant 0 : index
    %c0_6 = arith.constant 0 : index
    %c0_7 = arith.constant 0 : index
    %2 = vector.load %arg4[%c0_5, %c0_6, %c0_7] : memref<4x8x32xf32, #tpu.memory_space<vmem>>, vector<4x8x32xf32>
    %cst = arith.constant 0.176776692 : f32
    %3 = vector.broadcast %cst : f32 to vector<4x8x32xf32>
    %4 = arith.mulf %0, %3 : vector<4x8x32xf32>
    %cst_8 = arith.constant dense<0.000000e+00> : vector<4x8x8xf32>
    %5 = tpu.matmul %4, %1, %cst_8 {dimension_numbers = #tpu.dot_dimension_numbers<[2], [2], [1], [1], [0, 0, 0, 1, 1, 1], [0], [0]>} : vector<4x8x32xf32>, vector<4x8x32xf32>, vector<4x8x8xf32> -> vector<4x8x8xf32>
    %cst_9 = arith.constant dense<0xFF800000> : vector<4x8xf32>
    %6 = vector.multi_reduction <maximumf>, %5, %cst_9 [2] : vector<4x8x8xf32> to vector<4x8xf32>
    %7 = vector.shape_cast %6 : vector<4x8xf32> to vector<4x8x1xf32>
    %8 = vector.broadcast %7 : vector<4x8x1xf32> to vector<4x8x8xf32>
    %9 = arith.subf %5, %8 : vector<4x8x8xf32>
    %10 = math.exp %9 : vector<4x8x8xf32>
    %cst_10 = arith.constant dense<0.000000e+00> : vector<4x8xf32>
    %11 = vector.multi_reduction <add>, %10, %cst_10 [2] : vector<4x8x8xf32> to vector<4x8xf32>
    %12 = vector.shape_cast %11 : vector<4x8xf32> to vector<4x8x1xf32>
    %13 = tpu.reciprocal %12 {approx = true} : vector<4x8x1xf32> -> vector<4x8x1xf32>
    %14 = arith.mulf %12, %13 : vector<4x8x1xf32>
    %cst_11 = arith.constant 2.000000e+00 : f32
    %15 = vector.broadcast %cst_11 : f32 to vector<4x8x1xf32>
    %16 = arith.subf %15, %14 : vector<4x8x1xf32>
    %17 = arith.mulf %13, %16 : vector<4x8x1xf32>
    %18 = vector.broadcast %17 : vector<4x8x1xf32> to vector<4x8x8xf32>
    %19 = arith.mulf %10, %18 : vector<4x8x8xf32>
    %cst_12 = arith.constant dense<0.000000e+00> : vector<4x8x32xf32>
    %20 = tpu.matmul %19, %2, %cst_12 {dimension_numbers = #tpu.dot_dimension_numbers<[2], [1], [1], [2], [0, 0, 0, 1, 1, 2], [0], [0]>} : vector<4x8x8xf32>, vector<4x8x32xf32>, vector<4x8x32xf32> -> vector<4x8x32xf32>
    %c0_13 = arith.constant 0 : index
    %c0_14 = arith.constant 0 : index
    %c0_15 = arith.constant 0 : index
    %21 = vector.load %arg6[%c0_13, %c0_14, %c0_15] : memref<4x8x8xf32, #tpu.memory_space<vmem>>, vector<4x8x8xf32>
    tpu.vector_store %arg6[%c0_13, %c0_14, %c0_15], %19 {strides = array<i32>} : memref<4x8x8xf32, #tpu.memory_space<vmem>>, vector<4x8x8xf32>,
    %c0_16 = arith.constant 0 : index
    %c0_17 = arith.constant 0 : index
    %c0_18 = arith.constant 0 : index
    %22 = vector.load %arg5[%c0_16, %c0_17, %c0_18] : memref<4x8x32xf32, #tpu.memory_space<vmem>>, vector<4x8x32xf32>
    tpu.vector_store %arg5[%c0_16, %c0_17, %c0_18], %20 {strides = array<i32>} : memref<4x8x32xf32, #tpu.memory_space<vmem>>, vector<4x8x32xf32>,
    return
  }
  func.func @transform_0(%arg0: i32, %arg1: i32) -> (i32, i32, i32) {
    %c0_i32 = arith.constant 0 : i32
    %c0_i32_0 = arith.constant 0 : i32
    return %arg0, %arg1, %c0_i32 : i32, i32, i32
  }
  func.func @transform_1(%arg0: i32, %arg1: i32) -> (i32, i32, i32) {
    %c0_i32 = arith.constant 0 : i32
    %c0_i32_0 = arith.constant 0 : i32
    %c0_i32_1 = arith.constant 0 : i32
    return %arg0, %c0_i32, %c0_i32_0 : i32, i32, i32
  }
  func.func @transform_2(%arg0: i32, %arg1: i32) -> (i32, i32, i32) {
    %c0_i32 = arith.constant 0 : i32
    %c0_i32_0 = arith.constant 0 : i32
    %c0_i32_1 = arith.constant 0 : i32
    return %arg0, %c0_i32, %c0_i32_0 : i32, i32, i32
  }
  func.func @transform_3(%arg0: i32, %arg1: i32) -> (i32, i32, i32) {
    %c0_i32 = arith.constant 0 : i32
    %c0_i32_0 = arith.constant 0 : i32
    return %arg0, %arg1, %c0_i32 : i32, i32, i32
  }
  func.func @transform_4(%arg0: i32, %arg1: i32) -> (i32, i32, i32) {
    %c0_i32 = arith.constant 0 : i32
    %c0_i32_0 = arith.constant 0 : i32
    return %arg0, %arg1, %c0_i32 : i32, i32, i32
  }
}

</mosaic_0001>

<llo_original>
// kernel: tpu_custom_call.1
$region0: #{tpu_custom_call.1}
  #allocation0 [shape = 'u32[]', space=smem, size = 0x4, offset = 0x4, fixed_abs, tag = 'smem constant byte address 0x4 - core index']
  #allocation1 [shape = 'u32[144,128]{1,0:T(1,128)}', space=vmem, size = 0x12000, scoped, tag = 'internal scratch']
  %s0 = inlined_call_operand.hbm [shape: f32[4,8,32], index: 0, kind: input, shape index: {}]
  %s1 = inlined_call_operand.hbm [shape: f32[4,8,32], index: 1, kind: input, shape index: {}]
  %s2 = inlined_call_operand.hbm [shape: f32[4,8,32], index: 2, kind: input, shape index: {}]
  %s3 = inlined_call_operand.hbm [shape: f32[4,8,32], index: 3, kind: output, shape index: {0}]
  %s4 = inlined_call_operand.hbm [shape: f32[4,8,8], index: 4, kind: output, shape index: {1}]
  %5 = xla_tuple %s3, %s4
  %s6 = sld [smem:[#allocation0]]
  $region42: #{tpu_custom_call.1} parent=0
    _
  %s8 = ssub.s32 1, %s6
  %s9 = scalar_select 0, %s8, %s6
  $region1: #{tpu_custom_call.1} parent=0
    #allocation2 [shape = 'u8[16384]{0}', space=vmem, size = 0x4000, scoped, tag = 'input window, operand 0, single buffered']
    #allocation3 [shape = 's32[1]{0}', space=sflag, size = 0x4, scoped, tag = 'scoped memory for tpu_custom_call.1']
    #allocation4 [shape = 's32[1]{0}', space=sflag, size = 0x4, scoped, tag = 'scoped memory for tpu_custom_call.1']
    #allocation5 [shape = 'u8[16384]{0}', space=vmem, size = 0x4000, scoped, tag = 'input window, operand 1, single buffered']
    #allocation6 [shape = 's32[1]{0}', space=sflag, size = 0x4, scoped, tag = 'scoped memory for tpu_custom_call.1']
    #allocation7 [shape = 'u8[16384]{0}', space=vmem, size = 0x4000, scoped, tag = 'input window, operand 2, single buffered']
    #allocation8 [shape = 'u8[16384]{0}', space=vmem, size = 0x4000, scoped, tag = 'output window, operand 0, single buffered']
    #allocation9 [shape = 'u8[16384]{0}', space=vmem, size = 0x4000, scoped, tag = 'output window, operand 1, single buffered']
    #allocation10 [shape = 's32[1]{0}', space=sflag, size = 0x4, scoped, tag = 'scoped memory for tpu_custom_call.1']
    %10 = vsyncpa [#allocation3], 0
    %11 = vsyncpa [#allocation6], 0
    %12 = vsyncpa [#allocation4], 0
    %13 = vsyncpa [#allocation10], 0
    // Predicated region
    $region2: #{tpu_custom_call.1} parent=1 // pred_check
      _
    $region3: #{tpu_custom_call.1} parent=1 // pred_check_branch
      %15 = sbr.rel (0) target = $region5
    $region4: #{tpu_custom_call.1} parent=1 // pred_region
      %s17 = ssub.s32 512, 512
      %18 = vsyncadd [#allocation3], %s17
      %s19 = sshll.u32 [#allocation2], 4
      %s20 = int_to_ptr.vmem [resolvable:$true] %s19
      %25 = dma.hbm_to_vmem [thread:$0]  %s0, 512, %s20, [#allocation3], 128, 128, 8
    $region5: #{tpu_custom_call.1} parent=1 // pred_fallthru
      _
    // Predicated region
    $region6: #{tpu_custom_call.1} parent=1 // pred_check
      _
    $region7: #{tpu_custom_call.1} parent=1 // pred_check_branch
      %27 = sbr.rel (0) target = $region9
    $region8: #{tpu_custom_call.1} parent=1 // pred_region
      %s29 = ssub.s32 512, 512
      %30 = vsyncadd [#allocation6], %s29
      %s31 = sshll.u32 [#allocation5], 4
      %s32 = int_to_ptr.vmem [resolvable:$true] %s31
      %37 = dma.hbm_to_vmem [thread:$0]  %s1, 512, %s32, [#allocation6], 128, 128, 8
    $region9: #{tpu_custom_call.1} parent=1 // pred_fallthru
      _
    // Predicated region
    $region10: #{tpu_custom_call.1} parent=1 // pred_check
      _
    $region11: #{tpu_custom_call.1} parent=1 // pred_check_branch
      %39 = sbr.rel (0) target = $region13
    $region12: #{tpu_custom_call.1} parent=1 // pred_region
      %s41 = ssub.s32 512, 512
      %42 = vsyncadd [#allocation6], %s41
      %s43 = sshll.u32 [#allocation7], 4
      %s44 = int_to_ptr.vmem [resolvable:$true] %s43
      %49 = dma.hbm_to_vmem [thread:$0]  %s2, 512, %s44, [#allocation6], 128, 128, 8
    $region13: #{tpu_custom_call.1} parent=1 // pred_fallthru
      _
    // Predicated region
    $region14: #{tpu_custom_call.1} parent=1 // pred_check
      _
    $region15: #{tpu_custom_call.1} parent=1 // pred_check_branch
      %51 = sbr.rel (0) target = $region17
    $region16: #{tpu_custom_call.1} parent=1 // pred_region
      %52 = dma.done [#allocation3], 512
    $region17: #{tpu_custom_call.1} parent=1 // pred_fallthru
      _
    // Predicated region
    $region18: #{tpu_custom_call.1} parent=1 // pred_check
      _
    $region19: #{tpu_custom_call.1} parent=1 // pred_check_branch
      %54 = sbr.rel (0) target = $region21
    $region20: #{tpu_custom_call.1} parent=1 // pred_region
      %55 = dma.done [#allocation6], 512
    $region21: #{tpu_custom_call.1} parent=1 // pred_fallthru
      _
    // Predicated region
    $region22: #{tpu_custom_call.1} parent=1 // pred_check
      _
    $region23: #{tpu_custom_call.1} parent=1 // pred_check_branch
      %57 = sbr.rel (0) target = $region25
    $region24: #{tpu_custom_call.1} parent=1 // pred_region
      %58 = dma.done [#allocation6], 512
    $region25: #{tpu_custom_call.1} parent=1 // pred_fallthru
      _
    %v59 = vld [vmem:[#allocation2] sm:$0xff]
    %v60 = vld [vmem:[#allocation2 + $0x8] sm:$0xff]
    %v61 = vld [vmem:[#allocation2 + $0x10] sm:$0xff]
    %v62 = vld [vmem:[#allocation2 + $0x18] sm:$0xff]
    %v63 = vld [vmem:[#allocation5] sm:$0xff]
    %v64 = vld [vmem:[#allocation5 + $0x8] sm:$0xff]
    %v65 = vld [vmem:[#allocation5 + $0x10] sm:$0xff]
    %v66 = vld [vmem:[#allocation5 + $0x18] sm:$0xff]
    %v67 = vld [vmem:[#allocation7] sm:$0xff]
    %v68 = vld [vmem:[#allocation7 + $0x8] sm:$0xff]
    %v69 = vld [vmem:[#allocation7 + $0x10] sm:$0xff]
    %v70 = vld [vmem:[#allocation7 + $0x18] sm:$0xff]
    %v71 = vmul.f32 %v59, 0.17677669
    %v72 = vmul.f32 %v60, 0.17677669
    %v73 = vmul.f32 %v61, 0.17677669
    %v74 = vmul.f32 %v62, 0.17677669
    %vm75 = vcmask 261120
    %v77 = vsel %vm75, %v71, 0
    %v80 = vsel %vm75, %v63, 0
    %82 = vmatprep.subr.mxu0 0.0
    %83 = vmatpush1.xpose.msra.mxu0 %v80
    %84 = vmatprep.subr.mxu0 0.0
    %85 = vmatpush1.xpose.msra.mxu0 0.0
    %86 = vmatprep.subr.mxu0 0.0
    %87 = vmatpush1.xpose.msra.mxu0 0.0
    %88 = vmatprep.subr.mxu0 0.0
    %89 = vmatpush1.xpose.msra.mxu0 0.0
    %90 = vmatprep.subr.mxu0 0.0
    %91 = vmatpush1.xpose.msra.mxu0 0.0
    %92 = vmatprep.subr.mxu0 0.0
    %93 = vmatpush1.xpose.msra.mxu0 0.0
    %94 = vmatprep.subr.mxu0 0.0
    %95 = vmatpush1.xpose.msra.mxu0 0.0
    %96 = vmatprep.subr.mxu0 0.0
    %97 = vmatpush1.xpose.msra.mxu0 0.0
    %98 = vmatprep.subr.mxu0 0.0
    %99 = vmatpush1.xpose.msra.mxu0 0.0
    %100 = vmatprep.subr.mxu0 0.0
    %101 = vmatpush1.xpose.msra.mxu0 0.0
    %102 = vmatprep.subr.mxu0 0.0
    %103 = vmatpush1.xpose.msra.mxu0 0.0
    %104 = vmatprep.subr.mxu0 0.0
    %105 = vmatpush1.xpose.msra.mxu0 0.0
    %106 = vmatprep.subr.mxu0 0.0
    %107 = vmatpush1.xpose.msra.mxu0 0.0
    %108 = vmatprep.subr.mxu0 0.0
    %109 = vmatpush1.xpose.msra.mxu0 0.0
    %110 = vmatprep.subr.mxu0 0.0
    %111 = vmatpush1.xpose.msra.mxu0 0.0
    %112 = vmatprep.subr.mxu0 0.0
    %113 = vmatpush1.xpose.msra.mxu0 0.0
    %114 = vmatprep.subr.mxu0 0.0
    %115 = vmatpush1.xpose.msra.mxu0 0.0
    %116 = vmatprep.subr.mxu0 0.0
    %117 = vmatpush1.xpose.msra.mxu0 0.0
    %118 = vmatprep.subr.mxu0 0.0
    %119 = vmatpush1.xpose.msra.mxu0 0.0
    %120 = vmatprep.subr.mxu0 0.0
    %121 = vmatpush1.xpose.msra.mxu0 0.0
    %122 = vmatprep.subr.mxu0 0.0
    %123 = vmatpush1.xpose.msra.mxu0 0.0
    %124 = vmatprep.subr.mxu0 0.0
    %125 = vmatpush1.xpose.msra.mxu0 0.0
    %126 = vmatprep.subr.mxu0 0.0
    %127 = vmatpush1.xpose.msra.mxu0 0.0
    %128 = vmatprep.subr.mxu0 0.0
    %129 = vmatpush1.xpose.msra.mxu0 0.0
    %130 = vmatprep.subr.mxu0 0.0
    %131 = vmatpush1.xpose.msra.mxu0 0.0
    %132 = vmatprep.subr.mxu0 0.0
    %133 = vmatpush1.xpose.msra.mxu0 0.0
    %134 = vmatprep.subr.mxu0 0.0
    %135 = vmatpush1.xpose.msra.mxu0 0.0
    %136 = vmatprep.subr.mxu0 0.0
    %137 = vmatpush1.xpose.msra.mxu0 0.0
    %138 = vmatprep.subr.mxu0 0.0
    %139 = vmatpush1.xpose.msra.mxu0 0.0
    %140 = vmatprep.subr.mxu0 0.0
    %141 = vmatpush1.xpose.msra.mxu0 0.0
    %142 = vmatprep.subr.mxu0 0.0
    %143 = vmatpush1.xpose.msra.mxu0 0.0
    %144 = vmatprep.subr.mxu0 0.0
    %145 = vmatpush1.xpose.msra.mxu0 0.0
    %146 = vmatprep.mubr.f32.mxu0 0.0
    %147 = vmatmul.mubr.f32.gmra.mrb[0].mxu0 %v77
    %v148 = vpop.f32.mrb[0].mxu0
    %v149 = vadd.f32 0.0, %v148
    %v150 = vpop.f32.mrb[0].mxu0
    %151 = vdwg.mxu0
    %v153 = vsel %vm75, %v72, 0
    %v156 = vsel %vm75, %v64, 0
    %158 = vmatprep.subr.mxu0 0.0
    %159 = vmatpush1.xpose.msra.mxu0 %v156
    %160 = vmatprep.subr.mxu0 0.0
    %161 = vmatpush1.xpose.msra.mxu0 0.0
    %162 = vmatprep.subr.mxu0 0.0
    %163 = vmatpush1.xpose.msra.mxu0 0.0
    %164 = vmatprep.subr.mxu0 0.0
    %165 = vmatpush1.xpose.msra.mxu0 0.0
    %166 = vmatprep.subr.mxu0 0.0
    %167 = vmatpush1.xpose.msra.mxu0 0.0
    %168 = vmatprep.subr.mxu0 0.0
    %169 = vmatpush1.xpose.msra.mxu0 0.0
    %170 = vmatprep.subr.mxu0 0.0
    %171 = vmatpush1.xpose.msra.mxu0 0.0
    %172 = vmatprep.subr.mxu0 0.0
    %173 = vmatpush1.xpose.msra.mxu0 0.0
    %174 = vmatprep.subr.mxu0 0.0
    %175 = vmatpush1.xpose.msra.mxu0 0.0
    %176 = vmatprep.subr.mxu0 0.0
    %177 = vmatpush1.xpose.msra.mxu0 0.0
    %178 = vmatprep.subr.mxu0 0.0
    %179 = vmatpush1.xpose.msra.mxu0 0.0
    %180 = vmatprep.subr.mxu0 0.0
    %181 = vmatpush1.xpose.msra.mxu0 0.0
    %182 = vmatprep.subr.mxu0 0.0
    %183 = vmatpush1.xpose.msra.mxu0 0.0
    %184 = vmatprep.subr.mxu0 0.0
    %185 = vmatpush1.xpose.msra.mxu0 0.0
    %186 = vmatprep.subr.mxu0 0.0
    %187 = vmatpush1.xpose.msra.mxu0 0.0
    %188 = vmatprep.subr.mxu0 0.0
    %189 = vmatpush1.xpose.msra.mxu0 0.0
    %190 = vmatprep.subr.mxu0 0.0
    %191 = vmatpush1.xpose.msra.mxu0 0.0
    %192 = vmatprep.subr.mxu0 0.0
    %193 = vmatpush1.xpose.msra.mxu0 0.0
    %194 = vmatprep.subr.mxu0 0.0
    %195 = vmatpush1.xpose.msra.mxu0 0.0
    %196 = vmatprep.subr.mxu0 0.0
    %197 = vmatpush1.xpose.msra.mxu0 0.0
    %198 = vmatprep.subr.mxu0 0.0
    %199 = vmatpush1.xpose.msra.mxu0 0.0
    %200 = vmatprep.subr.mxu0 0.0
    %201 = vmatpush1.xpose.msra.mxu0 0.0
    %202 = vmatprep.subr.mxu0 0.0
    %203 = vmatpush1.xpose.msra.mxu0 0.0
    %204 = vmatprep.subr.mxu0 0.0
    %205 = vmatpush1.xpose.msra.mxu0 0.0
    %206 = vmatprep.subr.mxu0 0.0
    %207 = vmatpush1.xpose.msra.mxu0 0.0
    %208 = vmatprep.subr.mxu0 0.0
    %209 = vmatpush1.xpose.msra.mxu0 0.0
    %210 = vmatprep.subr.mxu0 0.0
    %211 = vmatpush1.xpose.msra.mxu0 0.0
    %212 = vmatprep.subr.mxu0 0.0
    %213 = vmatpush1.xpose.msra.mxu0 0.0
    %214 = vmatprep.subr.mxu0 0.0
    %215 = vmatpush1.xpose.msra.mxu0 0.0
    %216 = vmatprep.subr.mxu0 0.0
    %217 = vmatpush1.xpose.msra.mxu0 0.0
    %218 = vmatprep.subr.mxu0 0.0
    %219 = vmatpush1.xpose.msra.mxu0 0.0
    %220 = vmatprep.subr.mxu0 0.0
    %221 = vmatpush1.xpose.msra.mxu0 0.0
    %222 = vmatprep.mubr.f32.mxu0 0.0
    %223 = vmatmul.mubr.f32.gmra.mrb[0].mxu0 %v153
    %v224 = vpop.f32.mrb[0].mxu0
    %v225 = vadd.f32 0.0, %v224
    %v226 = vpop.f32.mrb[0].mxu0
    %227 = vdwg.mxu0
    %v229 = vsel %vm75, %v73, 0
    %v232 = vsel %vm75, %v65, 0
    %234 = vmatprep.subr.mxu0 0.0
    %235 = vmatpush1.xpose.msra.mxu0 %v232
    %236 = vmatprep.subr.mxu0 0.0
    %237 = vmatpush1.xpose.msra.mxu0 0.0
    %238 = vmatprep.subr.mxu0 0.0
    %239 = vmatpush1.xpose.msra.mxu0 0.0
    %240 = vmatprep.subr.mxu0 0.0
    %241 = vmatpush1.xpose.msra.mxu0 0.0
    %242 = vmatprep.subr.mxu0 0.0
    %243 = vmatpush1.xpose.msra.mxu0 0.0
    %244 = vmatprep.subr.mxu0 0.0
    %245 = vmatpush1.xpose.msra.mxu0 0.0
    %246 = vmatprep.subr.mxu0 0.0
    %247 = vmatpush1.xpose.msra.mxu0 0.0
    %248 = vmatprep.subr.mxu0 0.0
    %249 = vmatpush1.xpose.msra.mxu0 0.0
    %250 = vmatprep.subr.mxu0 0.0
    %251 = vmatpush1.xpose.msra.mxu0 0.0
    %252 = vmatprep.subr.mxu0 0.0
    %253 = vmatpush1.xpose.msra.mxu0 0.0
    %254 = vmatprep.subr.mxu0 0.0
    %255 = vmatpush1.xpose.msra.mxu0 0.0
    %256 = vmatprep.subr.mxu0 0.0
    %257 = vmatpush1.xpose.msra.mxu0 0.0
    %258 = vmatprep.subr.mxu0 0.0
    %259 = vmatpush1.xpose.msra.mxu0 0.0
    %260 = vmatprep.subr.mxu0 0.0
    %261 = vmatpush1.xpose.msra.mxu0 0.0
    %262 = vmatprep.subr.mxu0 0.0
    %263 = vmatpush1.xpose.msra.mxu0 0.0
    %264 = vmatprep.subr.mxu0 0.0
    %265 = vmatpush1.xpose.msra.mxu0 0.0
    %266 = vmatprep.subr.mxu0 0.0
    %267 = vmatpush1.xpose.msra.mxu0 0.0
    %268 = vmatprep.subr.mxu0 0.0
    %269 = vmatpush1.xpose.msra.mxu0 0.0
    %270 = vmatprep.subr.mxu0 0.0
    %271 = vmatpush1.xpose.msra.mxu0 0.0
    %272 = vmatprep.subr.mxu0 0.0
    %273 = vmatpush1.xpose.msra.mxu0 0.0
    %274 = vmatprep.subr.mxu0 0.0
    %275 = vmatpush1.xpose.msra.mxu0 0.0
    %276 = vmatprep.subr.mxu0 0.0
    %277 = vmatpush1.xpose.msra.mxu0 0.0
    %278 = vmatprep.subr.mxu0 0.0
    %279 = vmatpush1.xpose.msra.mxu0 0.0
    %280 = vmatprep.subr.mxu0 0.0
    %281 = vmatpush1.xpose.msra.mxu0 0.0
    %282 = vmatprep.subr.mxu0 0.0
    %283 = vmatpush1.xpose.msra.mxu0 0.0
    %284 = vmatprep.subr.mxu0 0.0
    %285 = vmatpush1.xpose.msra.mxu0 0.0
    %286 = vmatprep.subr.mxu0 0.0
    %287 = vmatpush1.xpose.msra.mxu0 0.0
    %288 = vmatprep.subr.mxu0 0.0
    %289 = vmatpush1.xpose.msra.mxu0 0.0
    %290 = vmatprep.subr.mxu0 0.0
    %291 = vmatpush1.xpose.msra.mxu0 0.0
    %292 = vmatprep.subr.mxu0 0.0
    %293 = vmatpush1.xpose.msra.mxu0 0.0
    %294 = vmatprep.subr.mxu0 0.0
    %295 = vmatpush1.xpose.msra.mxu0 0.0
    %296 = vmatprep.subr.mxu0 0.0
    %297 = vmatpush1.xpose.msra.mxu0 0.0
    %298 = vmatprep.mubr.f32.mxu0 0.0
    %299 = vmatmul.mubr.f32.gmra.mrb[0].mxu0 %v229
    %v300 = vpop.f32.mrb[0].mxu0
    %v301 = vadd.f32 0.0, %v300
    %v302 = vpop.f32.mrb[0].mxu0
    %303 = vdwg.mxu0
    %v305 = vsel %vm75, %v74, 0
    %v308 = vsel %vm75, %v66, 0
    %310 = vmatprep.subr.mxu0 0.0
    %311 = vmatpush1.xpose.msra.mxu0 %v308
    %312 = vmatprep.subr.mxu0 0.0
    %313 = vmatpush1.xpose.msra.mxu0 0.0
    %314 = vmatprep.subr.mxu0 0.0
    %315 = vmatpush1.xpose.msra.mxu0 0.0
    %316 = vmatprep.subr.mxu0 0.0
    %317 = vmatpush1.xpose.msra.mxu0 0.0
    %318 = vmatprep.subr.mxu0 0.0
    %319 = vmatpush1.xpose.msra.mxu0 0.0
    %320 = vmatprep.subr.mxu0 0.0
    %321 = vmatpush1.xpose.msra.mxu0 0.0
    %322 = vmatprep.subr.mxu0 0.0
    %323 = vmatpush1.xpose.msra.mxu0 0.0
    %324 = vmatprep.subr.mxu0 0.0
    %325 = vmatpush1.xpose.msra.mxu0 0.0
    %326 = vmatprep.subr.mxu0 0.0
    %327 = vmatpush1.xpose.msra.mxu0 0.0
    %328 = vmatprep.subr.mxu0 0.0
    %329 = vmatpush1.xpose.msra.mxu0 0.0
    %330 = vmatprep.subr.mxu0 0.0
    %331 = vmatpush1.xpose.msra.mxu0 0.0
    %332 = vmatprep.subr.mxu0 0.0
    %333 = vmatpush1.xpose.msra.mxu0 0.0
    %334 = vmatprep.subr.mxu0 0.0
    %335 = vmatpush1.xpose.msra.mxu0 0.0
    %336 = vmatprep.subr.mxu0 0.0
    %337 = vmatpush1.xpose.msra.mxu0 0.0
    %338 = vmatprep.subr.mxu0 0.0
    %339 = vmatpush1.xpose.msra.mxu0 0.0
    %340 = vmatprep.subr.mxu0 0.0
    %341 = vmatpush1.xpose.msra.mxu0 0.0
    %342 = vmatprep.subr.mxu0 0.0
    %343 = vmatpush1.xpose.msra.mxu0 0.0
    %344 = vmatprep.subr.mxu0 0.0
    %345 = vmatpush1.xpose.msra.mxu0 0.0
    %346 = vmatprep.subr.mxu0 0.0
    %347 = vmatpush1.xpose.msra.mxu0 0.0
    %348 = vmatprep.subr.mxu0 0.0
    %349 = vmatpush1.xpose.msra.mxu0 0.0
    %350 = vmatprep.subr.mxu0 0.0
    %351 = vmatpush1.xpose.msra.mxu0 0.0
    %352 = vmatprep.subr.mxu0 0.0
    %353 = vmatpush1.xpose.msra.mxu0 0.0
    %354 = vmatprep.subr.mxu0 0.0
    %355 = vmatpush1.xpose.msra.mxu0 0.0
    %356 = vmatprep.subr.mxu0 0.0
    %357 = vmatpush1.xpose.msra.mxu0 0.0
    %358 = vmatprep.subr.mxu0 0.0
    %359 = vmatpush1.xpose.msra.mxu0 0.0
    %360 = vmatprep.subr.mxu0 0.0
    %361 = vmatpush1.xpose.msra.mxu0 0.0
    %362 = vmatprep.subr.mxu0 0.0
    %363 = vmatpush1.xpose.msra.mxu0 0.0
    %364 = vmatprep.subr.mxu0 0.0
    %365 = vmatpush1.xpose.msra.mxu0 0.0
    %366 = vmatprep.subr.mxu0 0.0
    %367 = vmatpush1.xpose.msra.mxu0 0.0
    %368 = vmatprep.subr.mxu0 0.0
    %369 = vmatpush1.xpose.msra.mxu0 0.0
    %370 = vmatprep.subr.mxu0 0.0
    %371 = vmatpush1.xpose.msra.mxu0 0.0
    %372 = vmatprep.subr.mxu0 0.0
    %373 = vmatpush1.xpose.msra.mxu0 0.0
    %374 = vmatprep.mubr.f32.mxu0 0.0
    %375 = vmatmul.mubr.f32.gmra.mrb[0].mxu0 %v305
    %v376 = vpop.f32.mrb[0].mxu0
    %v377 = vadd.f32 0.0, %v376
    %v378 = vpop.f32.mrb[0].mxu0
    %379 = vdwg.mxu0
    %vm380 = vcmask 64512
    %v381 = vsel %vm380, %v149, -inf
    %382 = vmax.xlane.f32.xlu0 %v381
    %v383 = vpop.xlane.xlu0 %382
    %v384 = vsel %vm380, %v225, -inf
    %385 = vmax.xlane.f32.xlu0 %v384
    %v386 = vpop.xlane.xlu0 %385
    %v387 = vsel %vm380, %v301, -inf
    %388 = vmax.xlane.f32.xlu0 %v387
    %v389 = vpop.xlane.xlu0 %388
    %v390 = vsel %vm380, %v377, -inf
    %391 = vmax.xlane.f32.xlu0 %v390
    %v392 = vpop.xlane.xlu0 %391
    %v393 = vsub.f32 %v149, %v383
    %v394 = vsub.f32 %v225, %v386
    %v395 = vsub.f32 %v301, %v389
    %v396 = vsub.f32 %v377, %v392
    %v397 = vmul.f32 %v393, 1.442695
    %v398 = vpow.pop %v397
    %v399 = vmul.f32 %v394, 1.442695
    %v400 = vpow.pop %v399
    %v401 = vmul.f32 %v395, 1.442695
    %v402 = vpow.pop %v401
    %v403 = vmul.f32 %v396, 1.442695
    %v404 = vpow.pop %v403
    %v405 = vsel %vm380, %v398, 0.0
    %406 = vadd.xlane.f32.xlu0 %v405
    %v407 = vpop.xlane.xlu0 %406
    %v408 = vsel %vm380, %v400, 0.0
    %409 = vadd.xlane.f32.xlu0 %v408
    %v410 = vpop.xlane.xlu0 %409
    %v411 = vsel %vm380, %v402, 0.0
    %412 = vadd.xlane.f32.xlu0 %v411
    %v413 = vpop.xlane.xlu0 %412
    %v414 = vsel %vm380, %v404, 0.0
    %415 = vadd.xlane.f32.xlu0 %v414
    %v416 = vpop.xlane.xlu0 %415
    %v417 = vrcp.pop %v407
    %v418 = vrcp.pop %v410
    %v419 = vrcp.pop %v413
    %v420 = vrcp.pop %v416
    %v421 = vmul.f32 %v407, %v417
    %v422 = vmul.f32 %v410, %v418
    %v423 = vmul.f32 %v413, %v419
    %v424 = vmul.f32 %v416, %v420
    %v425 = vsub.f32 2.0, %v421
    %v426 = vsub.f32 2.0, %v422
    %v427 = vsub.f32 2.0, %v423
    %v428 = vsub.f32 2.0, %v424
    %v429 = vmul.f32 %v417, %v425
    %v430 = vmul.f32 %v418, %v426
    %v431 = vmul.f32 %v419, %v427
    %v432 = vmul.f32 %v420, %v428
    %v433 = vmul.f32 %v398, %v429
    %v434 = vmul.f32 %v400, %v430
    %v435 = vmul.f32 %v402, %v431
    %v436 = vmul.f32 %v404, %v432
    %v438 = vsel %vm380, %v433, 0
    %440 = vmatprep.subr.mxu0 0.0
    %441 = vmatpush1.msra.mxu0 %v67
    %442 = vmatprep.subr.mxu0 0.0
    %443 = vmatpush1.msra.mxu0 0.0
    %444 = vmatprep.subr.mxu0 0.0
    %445 = vmatpush1.msra.mxu0 0.0
    %446 = vmatprep.subr.mxu0 0.0
    %447 = vmatpush1.msra.mxu0 0.0
    %448 = vmatprep.subr.mxu0 0.0
    %449 = vmatpush1.msra.mxu0 0.0
    %450 = vmatprep.subr.mxu0 0.0
    %451 = vmatpush1.msra.mxu0 0.0
    %452 = vmatprep.subr.mxu0 0.0
    %453 = vmatpush1.msra.mxu0 0.0
    %454 = vmatprep.subr.mxu0 0.0
    %455 = vmatpush1.msra.mxu0 0.0
    %456 = vmatprep.subr.mxu0 0.0
    %457 = vmatpush1.msra.mxu0 0.0
    %458 = vmatprep.subr.mxu0 0.0
    %459 = vmatpush1.msra.mxu0 0.0
    %460 = vmatprep.subr.mxu0 0.0
    %461 = vmatpush1.msra.mxu0 0.0
    %462 = vmatprep.subr.mxu0 0.0
    %463 = vmatpush1.msra.mxu0 0.0
    %464 = vmatprep.subr.mxu0 0.0
    %465 = vmatpush1.msra.mxu0 0.0
    %466 = vmatprep.subr.mxu0 0.0
    %467 = vmatpush1.msra.mxu0 0.0
    %468 = vmatprep.subr.mxu0 0.0
    %469 = vmatpush1.msra.mxu0 0.0
    %470 = vmatprep.subr.mxu0 0.0
    %471 = vmatpush1.msra.mxu0 0.0
    %472 = vmatprep.subr.mxu0 0.0
    %473 = vmatpush1.msra.mxu0 0.0
    %474 = vmatprep.subr.mxu0 0.0
    %475 = vmatpush1.msra.mxu0 0.0
    %476 = vmatprep.subr.mxu0 0.0
    %477 = vmatpush1.msra.mxu0 0.0
    %478 = vmatprep.subr.mxu0 0.0
    %479 = vmatpush1.msra.mxu0 0.0
    %480 = vmatprep.subr.mxu0 0.0
    %481 = vmatpush1.msra.mxu0 0.0
    %482 = vmatprep.subr.mxu0 0.0
    %483 = vmatpush1.msra.mxu0 0.0
    %484 = vmatprep.subr.mxu0 0.0
    %485 = vmatpush1.msra.mxu0 0.0
    %486 = vmatprep.subr.mxu0 0.0
    %487 = vmatpush1.msra.mxu0 0.0
    %488 = vmatprep.subr.mxu0 0.0
    %489 = vmatpush1.msra.mxu0 0.0
    %490 = vmatprep.subr.mxu0 0.0
    %491 = vmatpush1.msra.mxu0 0.0
    %492 = vmatprep.subr.mxu0 0.0
    %493 = vmatpush1.msra.mxu0 0.0
    %494 = vmatprep.subr.mxu0 0.0
    %495 = vmatpush1.msra.mxu0 0.0
    %496 = vmatprep.subr.mxu0 0.0
    %497 = vmatpush1.msra.mxu0 0.0
    %498 = vmatprep.subr.mxu0 0.0
    %499 = vmatpush1.msra.mxu0 0.0
    %500 = vmatprep.subr.mxu0 0.0
    %501 = vmatpush1.msra.mxu0 0.0
    %502 = vmatprep.subr.mxu0 0.0
    %503 = vmatpush1.msra.mxu0 0.0
    %504 = vmatprep.mubr.f32.mxu0 0.0
    %505 = vmatmul.mubr.f32.gmra.mrb[0].mxu0 %v438
    %v506 = vpop.f32.mrb[0].mxu0
    %v507 = vadd.f32 0.0, %v506
    %v508 = vpop.f32.mrb[0].mxu0
    %509 = vdwg.mxu0
    %v511 = vsel %vm380, %v434, 0
    %513 = vmatprep.subr.mxu0 0.0
    %514 = vmatpush1.msra.mxu0 %v68
    %515 = vmatprep.subr.mxu0 0.0
    %516 = vmatpush1.msra.mxu0 0.0
    %517 = vmatprep.subr.mxu0 0.0
    %518 = vmatpush1.msra.mxu0 0.0
    %519 = vmatprep.subr.mxu0 0.0
    %520 = vmatpush1.msra.mxu0 0.0
    %521 = vmatprep.subr.mxu0 0.0
    %522 = vmatpush1.msra.mxu0 0.0
    %523 = vmatprep.subr.mxu0 0.0
    %524 = vmatpush1.msra.mxu0 0.0
    %525 = vmatprep.subr.mxu0 0.0
    %526 = vmatpush1.msra.mxu0 0.0
    %527 = vmatprep.subr.mxu0 0.0
    %528 = vmatpush1.msra.mxu0 0.0
    %529 = vmatprep.subr.mxu0 0.0
    %530 = vmatpush1.msra.mxu0 0.0
    %531 = vmatprep.subr.mxu0 0.0
    %532 = vmatpush1.msra.mxu0 0.0
    %533 = vmatprep.subr.mxu0 0.0
    %534 = vmatpush1.msra.mxu0 0.0
    %535 = vmatprep.subr.mxu0 0.0
    %536 = vmatpush1.msra.mxu0 0.0
    %537 = vmatprep.subr.mxu0 0.0
    %538 = vmatpush1.msra.mxu0 0.0
    %539 = vmatprep.subr.mxu0 0.0
    %540 = vmatpush1.msra.mxu0 0.0
    %541 = vmatprep.subr.mxu0 0.0
    %542 = vmatpush1.msra.mxu0 0.0
    %543 = vmatprep.subr.mxu0 0.0
    %544 = vmatpush1.msra.mxu0 0.0
    %545 = vmatprep.subr.mxu0 0.0
    %546 = vmatpush1.msra.mxu0 0.0
    %547 = vmatprep.subr.mxu0 0.0
    %548 = vmatpush1.msra.mxu0 0.0
    %549 = vmatprep.subr.mxu0 0.0
    %550 = vmatpush1.msra.mxu0 0.0
    %551 = vmatprep.subr.mxu0 0.0
    %552 = vmatpush1.msra.mxu0 0.0
    %553 = vmatprep.subr.mxu0 0.0
    %554 = vmatpush1.msra.mxu0 0.0
    %555 = vmatprep.subr.mxu0 0.0
    %556 = vmatpush1.msra.mxu0 0.0
    %557 = vmatprep.subr.mxu0 0.0
    %558 = vmatpush1.msra.mxu0 0.0
    %559 = vmatprep.subr.mxu0 0.0
    %560 = vmatpush1.msra.mxu0 0.0
    %561 = vmatprep.subr.mxu0 0.0
    %562 = vmatpush1.msra.mxu0 0.0
    %563 = vmatprep.subr.mxu0 0.0
    %564 = vmatpush1.msra.mxu0 0.0
    %565 = vmatprep.subr.mxu0 0.0
    %566 = vmatpush1.msra.mxu0 0.0
    %567 = vmatprep.subr.mxu0 0.0
    %568 = vmatpush1.msra.mxu0 0.0
    %569 = vmatprep.subr.mxu0 0.0
    %570 = vmatpush1.msra.mxu0 0.0
    %571 = vmatprep.subr.mxu0 0.0
    %572 = vmatpush1.msra.mxu0 0.0
    %573 = vmatprep.subr.mxu0 0.0
    %574 = vmatpush1.msra.mxu0 0.0
    %575 = vmatprep.subr.mxu0 0.0
    %576 = vmatpush1.msra.mxu0 0.0
    %577 = vmatprep.mubr.f32.mxu0 0.0
    %578 = vmatmul.mubr.f32.gmra.mrb[0].mxu0 %v511
    %v579 = vpop.f32.mrb[0].mxu0
    %v580 = vadd.f32 0.0, %v579
    %v581 = vpop.f32.mrb[0].mxu0
    %582 = vdwg.mxu0
    %v584 = vsel %vm380, %v435, 0
    %586 = vmatprep.subr.mxu0 0.0
    %587 = vmatpush1.msra.mxu0 %v69
    %588 = vmatprep.subr.mxu0 0.0
    %589 = vmatpush1.msra.mxu0 0.0
    %590 = vmatprep.subr.mxu0 0.0
    %591 = vmatpush1.msra.mxu0 0.0
    %592 = vmatprep.subr.mxu0 0.0
    %593 = vmatpush1.msra.mxu0 0.0
    %594 = vmatprep.subr.mxu0 0.0
    %595 = vmatpush1.msra.mxu0 0.0
    %596 = vmatprep.subr.mxu0 0.0
    %597 = vmatpush1.msra.mxu0 0.0
    %598 = vmatprep.subr.mxu0 0.0
    %599 = vmatpush1.msra.mxu0 0.0
    %600 = vmatprep.subr.mxu0 0.0
    %601 = vmatpush1.msra.mxu0 0.0
    %602 = vmatprep.subr.mxu0 0.0
    %603 = vmatpush1.msra.mxu0 0.0
    %604 = vmatprep.subr.mxu0 0.0
    %605 = vmatpush1.msra.mxu0 0.0
    %606 = vmatprep.subr.mxu0 0.0
    %607 = vmatpush1.msra.mxu0 0.0
    %608 = vmatprep.subr.mxu0 0.0
    %609 = vmatpush1.msra.mxu0 0.0
    %610 = vmatprep.subr.mxu0 0.0
    %611 = vmatpush1.msra.mxu0 0.0
    %612 = vmatprep.subr.mxu0 0.0
    %613 = vmatpush1.msra.mxu0 0.0
    %614 = vmatprep.subr.mxu0 0.0
    %615 = vmatpush1.msra.mxu0 0.0
    %616 = vmatprep.subr.mxu0 0.0
    %617 = vmatpush1.msra.mxu0 0.0
    %618 = vmatprep.subr.mxu0 0.0
    %619 = vmatpush1.msra.mxu0 0.0
    %620 = vmatprep.subr.mxu0 0.0
    %621 = vmatpush1.msra.mxu0 0.0
    %622 = vmatprep.subr.mxu0 0.0
    %623 = vmatpush1.msra.mxu0 0.0
    %624 = vmatprep.subr.mxu0 0.0
    %625 = vmatpush1.msra.mxu0 0.0
    %626 = vmatprep.subr.mxu0 0.0
    %627 = vmatpush1.msra.mxu0 0.0
    %628 = vmatprep.subr.mxu0 0.0
    %629 = vmatpush1.msra.mxu0 0.0
    %630 = vmatprep.subr.mxu0 0.0
    %631 = vmatpush1.msra.mxu0 0.0
    %632 = vmatprep.subr.mxu0 0.0
    %633 = vmatpush1.msra.mxu0 0.0
    %634 = vmatprep.subr.mxu0 0.0
    %635 = vmatpush1.msra.mxu0 0.0
    %636 = vmatprep.subr.mxu0 0.0
    %637 = vmatpush1.msra.mxu0 0.0
    %638 = vmatprep.subr.mxu0 0.0
    %639 = vmatpush1.msra.mxu0 0.0
    %640 = vmatprep.subr.mxu0 0.0
    %641 = vmatpush1.msra.mxu0 0.0
    %642 = vmatprep.subr.mxu0 0.0
    %643 = vmatpush1.msra.mxu0 0.0
    %644 = vmatprep.subr.mxu0 0.0
    %645 = vmatpush1.msra.mxu0 0.0
    %646 = vmatprep.subr.mxu0 0.0
    %647 = vmatpush1.msra.mxu0 0.0
    %648 = vmatprep.subr.mxu0 0.0
    %649 = vmatpush1.msra.mxu0 0.0
    %650 = vmatprep.mubr.f32.mxu0 0.0
    %651 = vmatmul.mubr.f32.gmra.mrb[0].mxu0 %v584
    %v652 = vpop.f32.mrb[0].mxu0
    %v653 = vadd.f32 0.0, %v652
    %v654 = vpop.f32.mrb[0].mxu0
    %655 = vdwg.mxu0
    %v657 = vsel %vm380, %v436, 0
    %659 = vmatprep.subr.mxu0 0.0
    %660 = vmatpush1.msra.mxu0 %v70
    %661 = vmatprep.subr.mxu0 0.0
    %662 = vmatpush1.msra.mxu0 0.0
    %663 = vmatprep.subr.mxu0 0.0
    %664 = vmatpush1.msra.mxu0 0.0
    %665 = vmatprep.subr.mxu0 0.0
    %666 = vmatpush1.msra.mxu0 0.0
    %667 = vmatprep.subr.mxu0 0.0
    %668 = vmatpush1.msra.mxu0 0.0
    %669 = vmatprep.subr.mxu0 0.0
    %670 = vmatpush1.msra.mxu0 0.0
    %671 = vmatprep.subr.mxu0 0.0
    %672 = vmatpush1.msra.mxu0 0.0
    %673 = vmatprep.subr.mxu0 0.0
    %674 = vmatpush1.msra.mxu0 0.0
    %675 = vmatprep.subr.mxu0 0.0
    %676 = vmatpush1.msra.mxu0 0.0
    %677 = vmatprep.subr.mxu0 0.0
    %678 = vmatpush1.msra.mxu0 0.0
    %679 = vmatprep.subr.mxu0 0.0
    %680 = vmatpush1.msra.mxu0 0.0
    %681 = vmatprep.subr.mxu0 0.0
    %682 = vmatpush1.msra.mxu0 0.0
    %683 = vmatprep.subr.mxu0 0.0
    %684 = vmatpush1.msra.mxu0 0.0
    %685 = vmatprep.subr.mxu0 0.0
    %686 = vmatpush1.msra.mxu0 0.0
    %687 = vmatprep.subr.mxu0 0.0
    %688 = vmatpush1.msra.mxu0 0.0
    %689 = vmatprep.subr.mxu0 0.0
    %690 = vmatpush1.msra.mxu0 0.0
    %691 = vmatprep.subr.mxu0 0.0
    %692 = vmatpush1.msra.mxu0 0.0
    %693 = vmatprep.subr.mxu0 0.0
    %694 = vmatpush1.msra.mxu0 0.0
    %695 = vmatprep.subr.mxu0 0.0
    %696 = vmatpush1.msra.mxu0 0.0
    %697 = vmatprep.subr.mxu0 0.0
    %698 = vmatpush1.msra.mxu0 0.0
    %699 = vmatprep.subr.mxu0 0.0
    %700 = vmatpush1.msra.mxu0 0.0
    %701 = vmatprep.subr.mxu0 0.0
    %702 = vmatpush1.msra.mxu0 0.0
    %703 = vmatprep.subr.mxu0 0.0
    %704 = vmatpush1.msra.mxu0 0.0
    %705 = vmatprep.subr.mxu0 0.0
    %706 = vmatpush1.msra.mxu0 0.0
    %707 = vmatprep.subr.mxu0 0.0
    %708 = vmatpush1.msra.mxu0 0.0
    %709 = vmatprep.subr.mxu0 0.0
    %710 = vmatpush1.msra.mxu0 0.0
    %711 = vmatprep.subr.mxu0 0.0
    %712 = vmatpush1.msra.mxu0 0.0
    %713 = vmatprep.subr.mxu0 0.0
    %714 = vmatpush1.msra.mxu0 0.0
    %715 = vmatprep.subr.mxu0 0.0
    %716 = vmatpush1.msra.mxu0 0.0
    %717 = vmatprep.subr.mxu0 0.0
    %718 = vmatpush1.msra.mxu0 0.0
    %719 = vmatprep.subr.mxu0 0.0
    %720 = vmatpush1.msra.mxu0 0.0
    %721 = vmatprep.subr.mxu0 0.0
    %722 = vmatpush1.msra.mxu0 0.0
    %723 = vmatprep.mubr.f32.mxu0 0.0
    %724 = vmatmul.mubr.f32.gmra.mrb[0].mxu0 %v657
    %v725 = vpop.f32.mrb[0].mxu0
    %v726 = vadd.f32 0.0, %v725
    %v727 = vpop.f32.mrb[0].mxu0
    %728 = vdwg.mxu0
    %729 = vst.msk [vmem:[#allocation9] sm:$0xff] %vm380, %v433
    %730 = vst.msk [vmem:[#allocation9 + $0x8] sm:$0xff] %vm380, %v434
    %731 = vst.msk [vmem:[#allocation9 + $0x10] sm:$0xff] %vm380, %v435
    %732 = vst.msk [vmem:[#allocation9 + $0x18] sm:$0xff] %vm380, %v436
    %733 = vst.msk [vmem:[#allocation8] sm:$0xff] %vm75, %v507
    %734 = vst.msk [vmem:[#allocation8 + $0x8] sm:$0xff] %vm75, %v580
    %735 = vst.msk [vmem:[#allocation8 + $0x10] sm:$0xff] %vm75, %v653
    %736 = vst.msk [vmem:[#allocation8 + $0x18] sm:$0xff] %vm75, %v726
    // Predicated region
    $region26: #{tpu_custom_call.1} parent=1 // pred_check
      _
    $region27: #{tpu_custom_call.1} parent=1 // pred_check_branch
      %738 = sbr.rel (0) target = $region29
    $region28: #{tpu_custom_call.1} parent=1 // pred_region
      %s740 = ssub.s32 512, 512
      %741 = vsyncadd [#allocation4], %s740
      %s742 = sshll.u32 [#allocation8], 4
      %s743 = int_to_ptr.vmem [resolvable:$true] %s742
      %748 = dma.vmem_to_hbm [thread:$0]  %s743, 512, %s3, [#allocation4], 128, 128, 8
    $region29: #{tpu_custom_call.1} parent=1 // pred_fallthru
      _
    // Predicated region
    $region30: #{tpu_custom_call.1} parent=1 // pred_check
      _
    $region31: #{tpu_custom_call.1} parent=1 // pred_check_branch
      %750 = sbr.rel (0) target = $region33
    $region32: #{tpu_custom_call.1} parent=1 // pred_region
      %s752 = ssub.s32 512, 512
      %753 = vsyncadd [#allocation10], %s752
      %s754 = sshll.u32 [#allocation9], 4
      %s755 = int_to_ptr.vmem [resolvable:$true] %s754
      %760 = dma.vmem_to_hbm [thread:$0]  %s755, 512, %s4, [#allocation10], 128, 128, 8
    $region33: #{tpu_custom_call.1} parent=1 // pred_fallthru
      _
    // Predicated region
    $region34: #{tpu_custom_call.1} parent=1 // pred_check
      _
    $region35: #{tpu_custom_call.1} parent=1 // pred_check_branch
      %762 = sbr.rel (0) target = $region37
    $region36: #{tpu_custom_call.1} parent=1 // pred_region
      %763 = dma.done [#allocation4], 512
    $region37: #{tpu_custom_call.1} parent=1 // pred_fallthru
      _
    // Predicated region
    $region38: #{tpu_custom_call.1} parent=1 // pred_check
      _
    $region39: #{tpu_custom_call.1} parent=1 // pred_check_branch
      %765 = sbr.rel (0) target = $region41
    $region40: #{tpu_custom_call.1} parent=1 // pred_region
      %766 = dma.done [#allocation10], 512
    $region41: #{tpu_custom_call.1} parent=1 // pred_fallthru
      _
    %767 = vsyncpa [#allocation3], 1
    %768 = vsyncpa [#allocation6], 1
    %769 = vsyncpa [#allocation4], 1
    %770 = vsyncpa [#allocation10], 1

</llo_original>
